<compile_context>
chip_gen: v5e
topology: v5e:2x2
jax: 0.10.0
libtpu: 0.0.40
codegen_flags: <defaults>
</compile_context>

<pallas_src>
import functools
import math

import jax
import jax.numpy as jnp
import numpy as np
from jax.experimental import pallas as pl
from jax.experimental.pallas import tpu as pltpu


def _make_kernel(S, num_groups, cg, L_in, L_out, Nb, eps, negative_slope):
    inv_cnt = 1.0 / float(cg * L_out)

    def kernel(x_ref, wt_ref, mask_ref, b_ref, gw_ref, gb_ref, out_ref):
        # x_ref:    (C_in, Nb*L_in)     f32  samples contiguous along lanes
        # wt_ref:   (S*C_out, C_in)     f32  rows (k, co); zero rows for k >= kernel_size
        # mask_ref: (S*C_out, L_in)     f32  1.0 where (tap k, input i) lands inside the crop
        # b/gw/gb:  (S*C_out, 1)        f32  per-(k, co) channel params (tiled over taps)
        # out_ref:  (S*C_out, Nb*L_in)  f32  tap-major output slab
        y_all = jnp.dot(wt_ref[...], x_ref[...],
                        preferred_element_type=jnp.float32)          # one MXU call, all taps+samples
        b = b_ref[...]
        # Leading-dim splits only (cg is a multiple of 8 by module construction) -> free.
        mask4 = mask_ref[...].reshape(S, num_groups, cg, L_in)
        gw4 = gw_ref[...].reshape(S, num_groups, cg, 1)
        gb4 = gb_ref[...].reshape(S, num_groups, cg, 1)

        def _gsum(t):  # reduce over taps, channels-in-group and length -> (1, G, 1, 1)
            t = jnp.sum(t, axis=3, keepdims=True)
            t = jnp.sum(t, axis=2, keepdims=True)
            return jnp.sum(t, axis=0, keepdims=True)

        pieces = []
        for n in range(Nb):                                   # static unroll over samples in tile
            y = y_all[:, n * L_in:(n + 1) * L_in] + b         # (S*C_out, L_in)
            y4 = y.reshape(S, num_groups, cg, L_in)

            mean = _gsum(y4 * mask4) * inv_cnt                # GroupNorm stats over valid positions
            d = (y4 - mean) * mask4                           # two-pass variance (stable)
            var = _gsum(d * d) * inv_cnt
            inv = jax.lax.rsqrt(var + eps)                    # EUP
            scale = gw4 * inv                                 # (S, G, cg, 1)
            shift = gb4 - mean * scale
            z = y4 * scale + shift                            # fused GN affine (one FMA)
            z = jnp.where(z >= 0, z, negative_slope * z)      # LeakyReLU
            pieces.append(z.reshape(S * num_groups * cg, L_in))

        out = pieces[0] if Nb == 1 else jnp.concatenate(pieces, axis=1)
        out_ref[...] = out.astype(out_ref.dtype)              # single lane-dense store

    return kernel


def trans_convolution_forward(x, weight, bias, gn_weight, gn_bias,
                              *, stride, kernel_size, num_groups,
                              eps=1e-5, negative_slope=0.01):
    """x: (N, C_in, L_in) f32. weight: (C_in, C_out, K) (ConvTranspose1d layout).
    padding = kernel_size - 1 (as in the PyTorch module). Returns (N, C_out, L_out) NCL."""
    N, C_in, L_in = x.shape
    _, C_out, K = weight.shape
    assert K == kernel_size
    pad = K - 1
    L_out = (L_in - 1) * stride - 2 * pad + K
    assert L_out > 0
    assert C_out % num_groups == 0
    cg = C_out // num_groups
    # TODO(synk): overlap-add path (taps sharing an output residue) for stride < kernel_size.
    assert stride >= K, "fast path assumes non-overlapping taps (stride >= kernel_size)"
    S = stride

    # ---- batch tiling: whole batch per grid step unless the lane axis gets large ----
    if N * L_in <= 1024:
        Nb = N
    else:
        need = 128 // math.gcd(L_in, 128)           # Nb*L_in must be a multiple of 128
        Nb = max(need, (max(1, 512 // L_in) // need) * need)
    Npad = ((N + Nb - 1) // Nb) * Nb
    num_tiles = Npad // Nb

    # ---- static prep (tiny; once per compile) ----
    # Fused tap weights: Wt2d[k*C_out + co, ci] = weight[ci, co, k]; zero rows for k >= K.
    wt = jnp.transpose(weight, (2, 1, 0)).astype(jnp.float32).reshape(K * C_out, C_in)
    if S > K:
        wt = jnp.concatenate([wt, jnp.zeros(((S - K) * C_out, C_in), jnp.float32)], axis=0)

    # Crop mask over (tap k, input i): is output l = i*stride - pad + k inside [0, L_out)?
    mask_np = np.zeros((S, L_in), np.float32)
    for k in range(S):
        for i in range(L_in):
            l = i * stride - pad + k
            if 0 <= l < L_out:
                mask_np[k, i] = 1.0
    assert int(mask_np.sum()) == L_out              # bijection (i, k) <-> kept output position
    mask_rep = jnp.asarray(np.repeat(mask_np, C_out, axis=0))        # (S*C_out, L_in)

    def _rep(v):  # per-channel param -> per-(k, co) row vector, avoids in-kernel reshuffles
        return jnp.tile(v.reshape(1, C_out).astype(jnp.float32), (S, 1)).reshape(S * C_out, 1)
    b_rep, gw_rep, gb_rep = _rep(bias), _rep(gn_weight), _rep(gn_bias)

    # x (N, C_in, L_in) -> (C_in, Npad*L_in): one-time wrapper transpose (layout plumbing).
    x2 = jnp.transpose(x.astype(jnp.float32), (1, 0, 2))             # (C_in, N, L_in)
    if Npad != N:
        x2 = jnp.pad(x2, ((0, 0), (0, Npad - N), (0, 0)))
    x2 = x2.reshape(C_in, Npad * L_in)

    kernel = _make_kernel(S, num_groups, cg, L_in, L_out, Nb, eps, negative_slope)

    out2d = pl.pallas_call(
        kernel,
        out_shape=jax.ShapeDtypeStruct((S * C_out, Npad * L_in), jnp.float32),
        grid=(num_tiles,),
        in_specs=[
            pl.BlockSpec((C_in, Nb * L_in), lambda t: (0, t)),        # x batch tile
            pl.BlockSpec((S * C_out, C_in), lambda t: (0, 0)),        # fused tap weights
            pl.BlockSpec((S * C_out, L_in), lambda t: (0, 0)),        # crop mask
            pl.BlockSpec((S * C_out, 1), lambda t: (0, 0)),           # bias
            pl.BlockSpec((S * C_out, 1), lambda t: (0, 0)),           # gn weight
            pl.BlockSpec((S * C_out, 1), lambda t: (0, 0)),           # gn bias
        ],
        out_specs=pl.BlockSpec((S * C_out, Nb * L_in), lambda t: (0, t)),
        compiler_params=pltpu.CompilerParams(dimension_semantics=("parallel",)),
    )(x2, wt, mask_rep, b_rep, gw_rep, gb_rep)

    # ---- wrapper-side layout plumbing: interleave taps (l = i*stride - pad + k) + crop ----
    out4 = out2d[:, :N * L_in].reshape(S, C_out, N, L_in)
    out = jnp.transpose(out4, (2, 1, 3, 0)).reshape(N, C_out, L_in * S)
    return out[:, :, pad:pad + L_out]                                 # (N, C_out, L_out) NCL


def _torch_semantics_reference(x, w, b, gw, gb, stride, pad, num_groups, eps, slope):
    """Brute-force numpy reference of ConvTranspose1d + GroupNorm + LeakyReLU."""
    x = np.asarray(x, np.float64)
    w = np.asarray(w, np.float64)
    N, C_in, L_in = x.shape
    _, C_out, K = w.shape
    L_out = (L_in - 1) * stride - 2 * pad + K
    out = np.zeros((N, C_out, L_out), np.float64)
    for n in range(N):
        for ci in range(C_in):
            for i in range(L_in):
                for co in range(C_out):
                    for k in range(K):
                        l = i * stride - pad + k
                        if 0 <= l < L_out:
                            out[n, co, l] += x[n, ci, i] * w[ci, co, k]
    out += np.asarray(b, np.float64)[None, :, None]
    cg = C_out // num_groups
    y = out.reshape(N, num_groups, cg, L_out)
    mean = y.mean(axis=(2, 3), keepdims=True)
    var = y.var(axis=(2, 3), keepdims=True)
    y = (y - mean) / np.sqrt(var + eps)
    y = y.reshape(N, C_out, L_out)
    y = y * np.asarray(gw, np.float64)[None, :, None] + np.asarray(gb, np.float64)[None, :, None]
    return np.where(y >= 0, y, slope * y)


if __name__ == "__main__":
    # Module config: trans_convolution(in_chs=4, out_chs=16, kernel_size=4, stride=4, with_bn=True)
    in_chs, out_chs, kernel_size, stride = 4, 16, 4, 4
    num_groups = out_chs // 8
    N, L_in = 2, 8

    key = jax.random.PRNGKey(0)
    k_x, k_w, k_b, k_gw, k_gb = jax.random.split(key, 5)
    x = jax.random.normal(k_x, (N, in_chs, L_in), jnp.float32)
    # ConvTranspose1d weight layout: (in_chs, out_chs, K)
    weight = 0.2 * jax.random.normal(k_w, (in_chs, out_chs, kernel_size), jnp.float32)
    bias = 0.1 * jax.random.normal(k_b, (out_chs,), jnp.float32)
    gn_weight = 1.0 + 0.1 * jax.random.normal(k_gw, (out_chs,), jnp.float32)
    gn_bias = 0.1 * jax.random.normal(k_gb, (out_chs,), jnp.float32)

    fwd = jax.jit(functools.partial(
        trans_convolution_forward,
        stride=stride, kernel_size=kernel_size, num_groups=num_groups))
    out = fwd(x, weight, bias, gn_weight, gn_bias)
    out = jax.block_until_ready(out)

    ref = _torch_semantics_reference(
        np.asarray(x), np.asarray(weight), np.asarray(bias),
        np.asarray(gn_weight), np.asarray(gn_bias),
        stride, kernel_size - 1, num_groups, 1e-5, 0.01)

    np.testing.assert_allclose(np.asarray(out), ref, rtol=2e-4, atol=2e-4)
    print("KERNEL_OK")
</pallas_src>

<mosaic_0001>
module attributes {stable_mosaic.version = 11 : i64} {
  func.func @kernel(%arg0: i32, %arg1: memref<4x16xf32, #tpu.memory_space<vmem>>, %arg2: memref<64x4xf32, #tpu.memory_space<vmem>>, %arg3: memref<64x8xf32, #tpu.memory_space<vmem>>, %arg4: memref<64x1xf32, #tpu.memory_space<vmem>>, %arg5: memref<64x1xf32, #tpu.memory_space<vmem>>, %arg6: memref<64x1xf32, #tpu.memory_space<vmem>>, %arg7: memref<64x16xf32, #tpu.memory_space<vmem>>) attributes {dimension_semantics = [#tpu.dimension_semantics<parallel>], iteration_bounds = array<i64: 1>, scalar_prefetch = 0 : i64, scratch_operands = 0 : i64, tpu.core_type = #tpu.core_type<tc>, window_params = [{transform_indices = @transform_0, window_bounds = array<i64: 4, 16>}, {pipeline_mode = #tpu.pipeline_mode<synchronous>, transform_indices = @transform_1, window_bounds = array<i64: 64, 4>}, {pipeline_mode = #tpu.pipeline_mode<synchronous>, transform_indices = @transform_2, window_bounds = array<i64: 64, 8>}, {pipeline_mode = #tpu.pipeline_mode<synchronous>, transform_indices = @transform_3, window_bounds = array<i64: 64, 1>}, {pipeline_mode = #tpu.pipeline_mode<synchronous>, transform_indices = @transform_4, window_bounds = array<i64: 64, 1>}, {pipeline_mode = #tpu.pipeline_mode<synchronous>, transform_indices = @transform_5, window_bounds = array<i64: 64, 1>}, {transform_indices = @transform_6, window_bounds = array<i64: 64, 16>}]} {
    %c0 = arith.constant 0 : index
    %c0_0 = arith.constant 0 : index
    %0 = vector.load %arg2[%c0, %c0_0] : memref<64x4xf32, #tpu.memory_space<vmem>>, vector<64x4xf32>
    %c0_1 = arith.constant 0 : index
    %c0_2 = arith.constant 0 : index
    %1 = vector.load %arg1[%c0_1, %c0_2] : memref<4x16xf32, #tpu.memory_space<vmem>>, vector<4x16xf32>
    %cst = arith.constant dense<0.000000e+00> : vector<64x16xf32>
    %2 = tpu.matmul %0, %1, %cst {dimension_numbers = #tpu.dot_dimension_numbers<[1], [0], [0], [1], [0, 0, 1, 1], [], []>} : vector<64x4xf32>, vector<4x16xf32>, vector<64x16xf32> -> vector<64x16xf32>
    %c0_3 = arith.constant 0 : index
    %c0_4 = arith.constant 0 : index
    %3 = vector.load %arg4[%c0_3, %c0_4] : memref<64x1xf32, #tpu.memory_space<vmem>>, vector<64x1xf32>
    %c0_5 = arith.constant 0 : index
    %c0_6 = arith.constant 0 : index
    %4 = vector.load %arg3[%c0_5, %c0_6] : memref<64x8xf32, #tpu.memory_space<vmem>>, vector<64x8xf32>
    %5 = vector.shape_cast %4 : vector<64x8xf32> to vector<4x2x8x8xf32>
    %c0_7 = arith.constant 0 : index
    %c0_8 = arith.constant 0 : index
    %6 = vector.load %arg5[%c0_7, %c0_8] : memref<64x1xf32, #tpu.memory_space<vmem>>, vector<64x1xf32>
    %7 = vector.shape_cast %6 : vector<64x1xf32> to vector<4x2x8x1xf32>
    %c0_9 = arith.constant 0 : index
    %c0_10 = arith.constant 0 : index
    %8 = vector.load %arg6[%c0_9, %c0_10] : memref<64x1xf32, #tpu.memory_space<vmem>>, vector<64x1xf32>
    %9 = vector.shape_cast %8 : vector<64x1xf32> to vector<4x2x8x1xf32>
    %10 = vector.extract_strided_slice %2 {offsets = [0, 0], sizes = [64, 8], strides = [1, 1]} : vector<64x16xf32> to vector<64x8xf32>
    %11 = vector.broadcast %3 : vector<64x1xf32> to vector<64x8xf32>
    %12 = arith.addf %10, %11 : vector<64x8xf32>
    %13 = vector.shape_cast %12 : vector<64x8xf32> to vector<4x2x8x8xf32>
    %14 = arith.mulf %13, %5 : vector<4x2x8x8xf32>
    %cst_11 = arith.constant dense<0.000000e+00> : vector<4x2x8xf32>
    %15 = vector.multi_reduction <add>, %14, %cst_11 [3] : vector<4x2x8x8xf32> to vector<4x2x8xf32>
    %16 = vector.shape_cast %15 : vector<4x2x8xf32> to vector<4x2x8x1xf32>
    %cst_12 = arith.constant dense<0.000000e+00> : vector<4x2x1xf32>
    %17 = vector.multi_reduction <add>, %16, %cst_12 [2] : vector<4x2x8x1xf32> to vector<4x2x1xf32>
    %18 = vector.shape_cast %17 : vector<4x2x1xf32> to vector<4x2x1x1xf32>
    %cst_13 = arith.constant dense<0.000000e+00> : vector<2x1x1xf32>
    %19 = vector.multi_reduction <add>, %18, %cst_13 [0] : vector<4x2x1x1xf32> to vector<2x1x1xf32>
    %20 = vector.shape_cast %19 : vector<2x1x1xf32> to vector<1x2x1x1xf32>
    %cst_14 = arith.constant 0.00480769249 : f32
    %21 = vector.broadcast %cst_14 : f32 to vector<1x2x1x1xf32>
    %22 = arith.mulf %20, %21 : vector<1x2x1x1xf32>
    %23 = vector.broadcast %22 : vector<1x2x1x1xf32> to vector<4x2x8x8xf32>
    %24 = arith.subf %13, %23 : vector<4x2x8x8xf32>
    %25 = arith.mulf %24, %5 : vector<4x2x8x8xf32>
    %26 = arith.mulf %25, %25 : vector<4x2x8x8xf32>
    %cst_15 = arith.constant dense<0.000000e+00> : vector<4x2x8xf32>
    %27 = vector.multi_reduction <add>, %26, %cst_15 [3] : vector<4x2x8x8xf32> to vector<4x2x8xf32>
    %28 = vector.shape_cast %27 : vector<4x2x8xf32> to vector<4x2x8x1xf32>
    %cst_16 = arith.constant dense<0.000000e+00> : vector<4x2x1xf32>
    %29 = vector.multi_reduction <add>, %28, %cst_16 [2] : vector<4x2x8x1xf32> to vector<4x2x1xf32>
    %30 = vector.shape_cast %29 : vector<4x2x1xf32> to vector<4x2x1x1xf32>
    %cst_17 = arith.constant dense<0.000000e+00> : vector<2x1x1xf32>
    %31 = vector.multi_reduction <add>, %30, %cst_17 [0] : vector<4x2x1x1xf32> to vector<2x1x1xf32>
    %32 = vector.shape_cast %31 : vector<2x1x1xf32> to vector<1x2x1x1xf32>
    %cst_18 = arith.constant 0.00480769249 : f32
    %33 = vector.broadcast %cst_18 : f32 to vector<1x2x1x1xf32>
    %34 = arith.mulf %32, %33 : vector<1x2x1x1xf32>
    %cst_19 = arith.constant 9.99999974E-6 : f32
    %35 = vector.broadcast %cst_19 : f32 to vector<1x2x1x1xf32>
    %36 = arith.addf %34, %35 : vector<1x2x1x1xf32>
    %37 = math.rsqrt %36 : vector<1x2x1x1xf32>
    %38 = vector.broadcast %37 : vector<1x2x1x1xf32> to vector<4x2x8x1xf32>
    %39 = arith.mulf %7, %38 : vector<4x2x8x1xf32>
    %40 = vector.broadcast %22 : vector<1x2x1x1xf32> to vector<4x2x8x1xf32>
    %41 = arith.mulf %40, %39 : vector<4x2x8x1xf32>
    %42 = arith.subf %9, %41 : vector<4x2x8x1xf32>
    %43 = vector.broadcast %39 : vector<4x2x8x1xf32> to vector<4x2x8x8xf32>
    %44 = arith.mulf %13, %43 : vector<4x2x8x8xf32>
    %45 = vector.broadcast %42 : vector<4x2x8x1xf32> to vector<4x2x8x8xf32>
    %46 = arith.addf %44, %45 : vector<4x2x8x8xf32>
    %cst_20 = arith.constant 0.000000e+00 : f32
    %47 = vector.broadcast %cst_20 : f32 to vector<4x2x8x8xf32>
    %48 = arith.cmpf oge, %46, %47 : vector<4x2x8x8xf32>
    %cst_21 = arith.constant 0.00999999977 : f32
    %49 = vector.broadcast %cst_21 : f32 to vector<4x2x8x8xf32>
    %50 = arith.mulf %49, %46 : vector<4x2x8x8xf32>
    %51 = arith.select %48, %46, %50 : vector<4x2x8x8xi1>, vector<4x2x8x8xf32>
    %52 = vector.shape_cast %51 : vector<4x2x8x8xf32> to vector<64x8xf32>
    %53 = vector.extract_strided_slice %2 {offsets = [0, 8], sizes = [64, 8], strides = [1, 1]} : vector<64x16xf32> to vector<64x8xf32>
    %54 = vector.broadcast %3 : vector<64x1xf32> to vector<64x8xf32>
    %55 = arith.addf %53, %54 : vector<64x8xf32>
    %56 = vector.shape_cast %55 : vector<64x8xf32> to vector<4x2x8x8xf32>
    %57 = arith.mulf %56, %5 : vector<4x2x8x8xf32>
    %cst_22 = arith.constant dense<0.000000e+00> : vector<4x2x8xf32>
    %58 = vector.multi_reduction <add>, %57, %cst_22 [3] : vector<4x2x8x8xf32> to vector<4x2x8xf32>
    %59 = vector.shape_cast %58 : vector<4x2x8xf32> to vector<4x2x8x1xf32>
    %cst_23 = arith.constant dense<0.000000e+00> : vector<4x2x1xf32>
    %60 = vector.multi_reduction <add>, %59, %cst_23 [2] : vector<4x2x8x1xf32> to vector<4x2x1xf32>
    %61 = vector.shape_cast %60 : vector<4x2x1xf32> to vector<4x2x1x1xf32>
    %cst_24 = arith.constant dense<0.000000e+00> : vector<2x1x1xf32>
    %62 = vector.multi_reduction <add>, %61, %cst_24 [0] : vector<4x2x1x1xf32> to vector<2x1x1xf32>
    %63 = vector.shape_cast %62 : vector<2x1x1xf32> to vector<1x2x1x1xf32>
    %cst_25 = arith.constant 0.00480769249 : f32
    %64 = vector.broadcast %cst_25 : f32 to vector<1x2x1x1xf32>
    %65 = arith.mulf %63, %64 : vector<1x2x1x1xf32>
    %66 = vector.broadcast %65 : vector<1x2x1x1xf32> to vector<4x2x8x8xf32>
    %67 = arith.subf %56, %66 : vector<4x2x8x8xf32>
    %68 = arith.mulf %67, %5 : vector<4x2x8x8xf32>
    %69 = arith.mulf %68, %68 : vector<4x2x8x8xf32>
    %cst_26 = arith.constant dense<0.000000e+00> : vector<4x2x8xf32>
    %70 = vector.multi_reduction <add>, %69, %cst_26 [3] : vector<4x2x8x8xf32> to vector<4x2x8xf32>
    %71 = vector.shape_cast %70 : vector<4x2x8xf32> to vector<4x2x8x1xf32>
    %cst_27 = arith.constant dense<0.000000e+00> : vector<4x2x1xf32>
    %72 = vector.multi_reduction <add>, %71, %cst_27 [2] : vector<4x2x8x1xf32> to vector<4x2x1xf32>
    %73 = vector.shape_cast %72 : vector<4x2x1xf32> to vector<4x2x1x1xf32>
    %cst_28 = arith.constant dense<0.000000e+00> : vector<2x1x1xf32>
    %74 = vector.multi_reduction <add>, %73, %cst_28 [0] : vector<4x2x1x1xf32> to vector<2x1x1xf32>
    %75 = vector.shape_cast %74 : vector<2x1x1xf32> to vector<1x2x1x1xf32>
    %cst_29 = arith.constant 0.00480769249 : f32
    %76 = vector.broadcast %cst_29 : f32 to vector<1x2x1x1xf32>
    %77 = arith.mulf %75, %76 : vector<1x2x1x1xf32>
    %cst_30 = arith.constant 9.99999974E-6 : f32
    %78 = vector.broadcast %cst_30 : f32 to vector<1x2x1x1xf32>
    %79 = arith.addf %77, %78 : vector<1x2x1x1xf32>
    %80 = math.rsqrt %79 : vector<1x2x1x1xf32>
    %81 = vector.broadcast %80 : vector<1x2x1x1xf32> to vector<4x2x8x1xf32>
    %82 = arith.mulf %7, %81 : vector<4x2x8x1xf32>
    %83 = vector.broadcast %65 : vector<1x2x1x1xf32> to vector<4x2x8x1xf32>
    %84 = arith.mulf %83, %82 : vector<4x2x8x1xf32>
    %85 = arith.subf %9, %84 : vector<4x2x8x1xf32>
    %86 = vector.broadcast %82 : vector<4x2x8x1xf32> to vector<4x2x8x8xf32>
    %87 = arith.mulf %56, %86 : vector<4x2x8x8xf32>
    %88 = vector.broadcast %85 : vector<4x2x8x1xf32> to vector<4x2x8x8xf32>
    %89 = arith.addf %87, %88 : vector<4x2x8x8xf32>
    %cst_31 = arith.constant 0.000000e+00 : f32
    %90 = vector.broadcast %cst_31 : f32 to vector<4x2x8x8xf32>
    %91 = arith.cmpf oge, %89, %90 : vector<4x2x8x8xf32>
    %cst_32 = arith.constant 0.00999999977 : f32
    %92 = vector.broadcast %cst_32 : f32 to vector<4x2x8x8xf32>
    %93 = arith.mulf %92, %89 : vector<4x2x8x8xf32>
    %94 = arith.select %91, %89, %93 : vector<4x2x8x8xi1>, vector<4x2x8x8xf32>
    %95 = vector.shape_cast %94 : vector<4x2x8x8xf32> to vector<64x8xf32>
    %96 = tpu.concatenate %52, %95 in 1 : vector<64x8xf32>, vector<64x8xf32> -> vector<64x16xf32>
    %c0_33 = arith.constant 0 : index
    %c0_34 = arith.constant 0 : index
    %97 = vector.load %arg7[%c0_33, %c0_34] : memref<64x16xf32, #tpu.memory_space<vmem>>, vector<64x16xf32>
    tpu.vector_store %arg7[%c0_33, %c0_34], %96 {strides = array<i32>} : memref<64x16xf32, #tpu.memory_space<vmem>>, vector<64x16xf32>,
    return
  }
  func.func @transform_0(%arg0: i32) -> (i32, i32) {
    %c0_i32 = arith.constant 0 : i32
    %c0_i32_0 = arith.constant 0 : i32
    return %c0_i32, %arg0 : i32, i32
  }
  func.func @transform_1(%arg0: i32) -> (i32, i32) {
    %c0_i32 = arith.constant 0 : i32
    %c0_i32_0 = arith.constant 0 : i32
    %c0_i32_1 = arith.constant 0 : i32
    return %c0_i32, %c0_i32_0 : i32, i32
  }
  func.func @transform_2(%arg0: i32) -> (i32, i32) {
    %c0_i32 = arith.constant 0 : i32
    %c0_i32_0 = arith.constant 0 : i32
    %c0_i32_1 = arith.constant 0 : i32
    return %c0_i32, %c0_i32_0 : i32, i32
  }
  func.func @transform_3(%arg0: i32) -> (i32, i32) {
    %c0_i32 = arith.constant 0 : i32
    %c0_i32_0 = arith.constant 0 : i32
    %c0_i32_1 = arith.constant 0 : i32
    return %c0_i32, %c0_i32_0 : i32, i32
  }
  func.func @transform_4(%arg0: i32) -> (i32, i32) {
    %c0_i32 = arith.constant 0 : i32
    %c0_i32_0 = arith.constant 0 : i32
    %c0_i32_1 = arith.constant 0 : i32
    return %c0_i32, %c0_i32_0 : i32, i32
  }
  func.func @transform_5(%arg0: i32) -> (i32, i32) {
    %c0_i32 = arith.constant 0 : i32
    %c0_i32_0 = arith.constant 0 : i32
    %c0_i32_1 = arith.constant 0 : i32
    return %c0_i32, %c0_i32_0 : i32, i32
  }
  func.func @transform_6(%arg0: i32) -> (i32, i32) {
    %c0_i32 = arith.constant 0 : i32
    %c0_i32_0 = arith.constant 0 : i32
    return %c0_i32, %arg0 : i32, i32
  }
}

</mosaic_0001>

<llo_original>
// kernel: tile.14
$region0: #{tile.14}
  #allocation0 [shape = 's32[1]{0}', space=sflag, size = 0x4, scoped, tag = 'scoped memory for tile.14']
  %s0 = inlined_call_operand.vmem [shape: f32[16], index: 0, kind: input, shape index: {}]
  %s1 = inlined_call_operand.vmem [shape: f32[4,1,1,16], index: 1, kind: output, shape index: {}]
  // Predicated region
  $region2: #{tile.14} parent=0 // pred_check
    _
  $region3: #{tile.14} parent=0 // pred_check_branch
    %3 = sbr.rel (0) target = $region5
  $region4: #{tile.14} parent=0 // pred_region
    _
  $region5: #{tile.14} parent=0 // pred_fallthru
    _
  %v4 = vld [vmem:[%s0] ss:$0 sm:$0xff]
  %5 = vst [vmem:[%s1] sm:$0xf] %v4

// kernel: tile.2
$region0: #{tile.2}
  %s0 = inlined_call_operand.vmem [shape: f32[4,1,1,16], index: 0, kind: input, shape index: {}]
  %s1 = inlined_call_operand.vmem [shape: f32[64,1], index: 1, kind: output, shape index: {}]
  $region1: #{tile.2} parent=0
    #allocation0 [shape = 'u8[4096]{0}', space=vmem, size = 0x1000, scoped, tag = 'scoped mem for input reshape']
    %s3 = ssub.s32 16, 1
    %v4 = vld [vmem:[%s0] sm:%s3]
    %5 = vst [vmem:[#allocation0] sm:%s3] %v4
    %v6 = vld [vmem:[#allocation0] sm:$0xf]
    %vm7 = vcmask 7168
    %8 = vst.msk [vmem:[%s1] ss:$16 sm:$0x3] %vm7, %v6
    %9 = vst.msk [vmem:[%s1] ss:$16 sm:$0xc] %vm7, %v6
    %v10 = vld [vmem:[#allocation0] sm:$0xf]
    %11 = vrot.lane.b32.xlu0 %v10, 127
    %v12 = vpop.permute.xlu0 %11
    %vm13 = vcmask 7168
    %s14 = scalar_lea.vmem %s1, 1
    %15 = vst.msk [vmem:[%s14] ss:$16 sm:$0x3] %vm13, %v12
    %s16 = scalar_lea.vmem %s1, 1
    %17 = vst.msk [vmem:[%s16] ss:$16 sm:$0xc] %vm13, %v12
    %v18 = vld [vmem:[#allocation0] sm:$0xf]
    %19 = vrot.lane.b32.xlu0 %v18, 126
    %v20 = vpop.permute.xlu0 %19
    %vm21 = vcmask 7168
    %s22 = scalar_lea.vmem %s1, 2
    %23 = vst.msk [vmem:[%s22] ss:$16 sm:$0x3] %vm21, %v20
    %s24 = scalar_lea.vmem %s1, 2
    %25 = vst.msk [vmem:[%s24] ss:$16 sm:$0xc] %vm21, %v20
    %v26 = vld [vmem:[#allocation0] sm:$0xf]
    %27 = vrot.lane.b32.xlu0 %v26, 125
    %v28 = vpop.permute.xlu0 %27
    %vm29 = vcmask 7168
    %s30 = scalar_lea.vmem %s1, 3
    %31 = vst.msk [vmem:[%s30] ss:$16 sm:$0x3] %vm29, %v28
    %s32 = scalar_lea.vmem %s1, 3
    %33 = vst.msk [vmem:[%s32] ss:$16 sm:$0xc] %vm29, %v28
    %v34 = vld [vmem:[#allocation0] sm:$0xf]
    %35 = vrot.lane.b32.xlu0 %v34, 124
    %v36 = vpop.permute.xlu0 %35
    %vm37 = vcmask 7168
    %s38 = scalar_lea.vmem %s1, 4
    %39 = vst.msk [vmem:[%s38] ss:$16 sm:$0x3] %vm37, %v36
    %s40 = scalar_lea.vmem %s1, 4
    %41 = vst.msk [vmem:[%s40] ss:$16 sm:$0xc] %vm37, %v36
    %v42 = vld [vmem:[#allocation0] sm:$0xf]
    %43 = vrot.lane.b32.xlu0 %v42, 123
    %v44 = vpop.permute.xlu0 %43
    %vm45 = vcmask 7168
    %s46 = scalar_lea.vmem %s1, 5
    %47 = vst.msk [vmem:[%s46] ss:$16 sm:$0x3] %vm45, %v44
    %s48 = scalar_lea.vmem %s1, 5
    %49 = vst.msk [vmem:[%s48] ss:$16 sm:$0xc] %vm45, %v44
    %v50 = vld [vmem:[#allocation0] sm:$0xf]
    %51 = vrot.lane.b32.xlu0 %v50, 122
    %v52 = vpop.permute.xlu0 %51
    %vm53 = vcmask 7168
    %s54 = scalar_lea.vmem %s1, 6
    %55 = vst.msk [vmem:[%s54] ss:$16 sm:$0x3] %vm53, %v52
    %s56 = scalar_lea.vmem %s1, 6
    %57 = vst.msk [vmem:[%s56] ss:$16 sm:$0xc] %vm53, %v52
    %v58 = vld [vmem:[#allocation0] sm:$0xf]
    %59 = vrot.lane.b32.xlu0 %v58, 121
    %v60 = vpop.permute.xlu0 %59
    %vm61 = vcmask 7168
    %s62 = scalar_lea.vmem %s1, 7
    %63 = vst.msk [vmem:[%s62] ss:$16 sm:$0x3] %vm61, %v60
    %s64 = scalar_lea.vmem %s1, 7
    %65 = vst.msk [vmem:[%s64] ss:$16 sm:$0xc] %vm61, %v60
    %v66 = vld [vmem:[#allocation0] sm:$0xf]
    %67 = vrot.lane.b32.xlu0 %v66, 120
    %v68 = vpop.permute.xlu0 %67
    %vm69 = vcmask 7168
    %s70 = scalar_lea.vmem %s1, 8
    %71 = vst.msk [vmem:[%s70] ss:$16 sm:$0x3] %vm69, %v68
    %s72 = scalar_lea.vmem %s1, 8
    %73 = vst.msk [vmem:[%s72] ss:$16 sm:$0xc] %vm69, %v68
    %v74 = vld [vmem:[#allocation0] sm:$0xf]
    %75 = vrot.lane.b32.xlu0 %v74, 119
    %v76 = vpop.permute.xlu0 %75
    %vm77 = vcmask 7168
    %s78 = scalar_lea.vmem %s1, 9
    %79 = vst.msk [vmem:[%s78] ss:$16 sm:$0x3] %vm77, %v76
    %s80 = scalar_lea.vmem %s1, 9
    %81 = vst.msk [vmem:[%s80] ss:$16 sm:$0xc] %vm77, %v76
    %v82 = vld [vmem:[#allocation0] sm:$0xf]
    %83 = vrot.lane.b32.xlu0 %v82, 118
    %v84 = vpop.permute.xlu0 %83
    %vm85 = vcmask 7168
    %s86 = scalar_lea.vmem %s1, 10
    %87 = vst.msk [vmem:[%s86] ss:$16 sm:$0x3] %vm85, %v84
    %s88 = scalar_lea.vmem %s1, 10
    %89 = vst.msk [vmem:[%s88] ss:$16 sm:$0xc] %vm85, %v84
    %v90 = vld [vmem:[#allocation0] sm:$0xf]
    %91 = vrot.lane.b32.xlu0 %v90, 117
    %v92 = vpop.permute.xlu0 %91
    %vm93 = vcmask 7168
    %s94 = scalar_lea.vmem %s1, 11
    %95 = vst.msk [vmem:[%s94] ss:$16 sm:$0x3] %vm93, %v92
    %s96 = scalar_lea.vmem %s1, 11
    %97 = vst.msk [vmem:[%s96] ss:$16 sm:$0xc] %vm93, %v92
    %v98 = vld [vmem:[#allocation0] sm:$0xf]
    %99 = vrot.lane.b32.xlu0 %v98, 116
    %v100 = vpop.permute.xlu0 %99
    %vm101 = vcmask 7168
    %s102 = scalar_lea.vmem %s1, 12
    %103 = vst.msk [vmem:[%s102] ss:$16 sm:$0x3] %vm101, %v100
    %s104 = scalar_lea.vmem %s1, 12
    %105 = vst.msk [vmem:[%s104] ss:$16 sm:$0xc] %vm101, %v100
    %v106 = vld [vmem:[#allocation0] sm:$0xf]
    %107 = vrot.lane.b32.xlu0 %v106, 115
    %v108 = vpop.permute.xlu0 %107
    %vm109 = vcmask 7168
    %s110 = scalar_lea.vmem %s1, 13
    %111 = vst.msk [vmem:[%s110] ss:$16 sm:$0x3] %vm109, %v108
    %s112 = scalar_lea.vmem %s1, 13
    %113 = vst.msk [vmem:[%s112] ss:$16 sm:$0xc] %vm109, %v108
    %v114 = vld [vmem:[#allocation0] sm:$0xf]
    %115 = vrot.lane.b32.xlu0 %v114, 114
    %v116 = vpop.permute.xlu0 %115
    %vm117 = vcmask 7168
    %s118 = scalar_lea.vmem %s1, 14
    %119 = vst.msk [vmem:[%s118] ss:$16 sm:$0x3] %vm117, %v116
    %s120 = scalar_lea.vmem %s1, 14
    %121 = vst.msk [vmem:[%s120] ss:$16 sm:$0xc] %vm117, %v116
    %v122 = vld [vmem:[#allocation0] sm:$0xf]
    %123 = vrot.lane.b32.xlu0 %v122, 113
    %v124 = vpop.permute.xlu0 %123
    %vm125 = vcmask 7168
    %s126 = scalar_lea.vmem %s1, 15
    %127 = vst.msk [vmem:[%s126] ss:$16 sm:$0x3] %vm125, %v124
    %s128 = scalar_lea.vmem %s1, 15
    %129 = vst.msk [vmem:[%s128] ss:$16 sm:$0xc] %vm125, %v124

// kernel: trans_convolution_forward.1
$region0: #{trans_convolution_forward.1}
  #allocation0 [shape = 'u32[]', space=smem, size = 0x4, offset = 0x4, fixed_abs, tag = 'smem constant byte address 0x4 - core index']
  #allocation1 [shape = 'u32[72,128]{1,0:T(1,128)}', space=vmem, size = 0x9000, scoped, tag = 'internal scratch']
  %s0 = inlined_call_operand.vmem [shape: f32[4,16], index: 0, kind: input, shape index: {}]
  %s1 = inlined_call_operand.vmem [shape: f32[64,4], index: 1, kind: input, shape index: {}]
  %s2 = inlined_call_operand.vmem [shape: f32[64,8], index: 2, kind: input, shape index: {}]
  %s3 = inlined_call_operand.vmem [shape: f32[64,1], index: 3, kind: input, shape index: {}]
  %s4 = inlined_call_operand.vmem [shape: f32[64,1], index: 4, kind: input, shape index: {}]
  %s5 = inlined_call_operand.vmem [shape: f32[64,1], index: 5, kind: input, shape index: {}]
  %s6 = inlined_call_operand.vmem [shape: f32[64,16], index: 6, kind: output, shape index: {}]
  %s7 = sld [smem:[#allocation0]]
  $region34: #{trans_convolution_forward.1} parent=0
    _
  %s9 = ssub.s32 1, %s7
  %s10 = scalar_select 0, %s9, %s7
  // Predicated region
  $region2: #{trans_convolution_forward.1} parent=0 // pred_check
    _
  $region3: #{trans_convolution_forward.1} parent=0 // pred_check_branch
    %12 = sbr.rel (0) target = $region5
  $region4: #{trans_convolution_forward.1} parent=0 // pred_region
    _
  $region5: #{trans_convolution_forward.1} parent=0 // pred_fallthru
    _
  // Predicated region
  $region6: #{trans_convolution_forward.1} parent=0 // pred_check
    _
  $region7: #{trans_convolution_forward.1} parent=0 // pred_check_branch
    %14 = sbr.rel (0) target = $region9
  $region8: #{trans_convolution_forward.1} parent=0 // pred_region
    _
  $region9: #{trans_convolution_forward.1} parent=0 // pred_fallthru
    _
  // Predicated region
  $region10: #{trans_convolution_forward.1} parent=0 // pred_check
    _
  $region11: #{trans_convolution_forward.1} parent=0 // pred_check_branch
    %16 = sbr.rel (0) target = $region13
  $region12: #{trans_convolution_forward.1} parent=0 // pred_region
    _
  $region13: #{trans_convolution_forward.1} parent=0 // pred_fallthru
    _
  // Predicated region
  $region14: #{trans_convolution_forward.1} parent=0 // pred_check
    _
  $region15: #{trans_convolution_forward.1} parent=0 // pred_check_branch
    %18 = sbr.rel (0) target = $region17
  $region16: #{trans_convolution_forward.1} parent=0 // pred_region
    _
  $region17: #{trans_convolution_forward.1} parent=0 // pred_fallthru
    _
  // Predicated region
  $region18: #{trans_convolution_forward.1} parent=0 // pred_check
    _
  $region19: #{trans_convolution_forward.1} parent=0 // pred_check_branch
    %20 = sbr.rel (0) target = $region21
  $region20: #{trans_convolution_forward.1} parent=0 // pred_region
    _
  $region21: #{trans_convolution_forward.1} parent=0 // pred_fallthru
    _
  // Predicated region
  $region22: #{trans_convolution_forward.1} parent=0 // pred_check
    _
  $region23: #{trans_convolution_forward.1} parent=0 // pred_check_branch
    %22 = sbr.rel (0) target = $region25
  $region24: #{trans_convolution_forward.1} parent=0 // pred_region
    _
  $region25: #{trans_convolution_forward.1} parent=0 // pred_fallthru
    _
  %v23 = vld [vmem:[%s1] sm:$0xff]
  %v24 = vld [vmem:[%s1 + $0x8] sm:$0xff]
  %v25 = vld [vmem:[%s1 + $0x10] sm:$0xff]
  %v26 = vld [vmem:[%s1 + $0x18] sm:$0xff]
  %v27 = vld [vmem:[%s1 + $0x20] sm:$0xff]
  %v28 = vld [vmem:[%s1 + $0x28] sm:$0xff]
  %v29 = vld [vmem:[%s1 + $0x30] sm:$0xff]
  %v30 = vld [vmem:[%s1 + $0x38] sm:$0xff]
  %v31 = vld [vmem:[%s0] sm:$0xf]
  %vm32 = vcmask 31744
  %v34 = vsel %vm32, %v23, 0
  %v37 = vsel %vm32, %v24, 0
  %v40 = vsel %vm32, %v25, 0
  %v43 = vsel %vm32, %v26, 0
  %v46 = vsel %vm32, %v27, 0
  %v49 = vsel %vm32, %v28, 0
  %v52 = vsel %vm32, %v29, 0
  %v55 = vsel %vm32, %v30, 0
  %vm57 = vcmask 1043456
  %v59 = vsel %vm57, %v31, 0
  %61 = vmatpush.msra.mxu0 0.0
  %62 = vmatpush.msra.mxu0 0.0
  %63 = vmatpush.msra.mxu0 0.0
  %64 = vmatpush.msra.mxu0 0.0
  %65 = vmatpush.msra.mxu0 0.0
  %66 = vmatpush.msra.mxu0 0.0
  %67 = vmatpush.msra.mxu0 0.0
  %68 = vmatpush.msra.mxu0 0.0
  %69 = vmatpush.msra.mxu0 0.0
  %70 = vmatpush.msra.mxu0 0.0
  %71 = vmatpush.msra.mxu0 0.0
  %72 = vmatpush.msra.mxu0 0.0
  %73 = vmatpush.msra.mxu0 0.0
  %74 = vmatpush.msra.mxu0 0.0
  %75 = vmatpush.msra.mxu0 0.0
  %76 = vmatpush.msra.mxu0 %v59
  %77 = vmatmul.f32.gmra.mxu0 %v34
  %v78 = vpop.f32.mrf.mxu0
  %v79 = vadd.f32 0.0, %v78
  %80 = vmatmul.f32.gmra.mxu0 %v37
  %v81 = vpop.f32.mrf.mxu0
  %v82 = vadd.f32 0.0, %v81
  %83 = vmatmul.f32.gmra.mxu0 %v40
  %v84 = vpop.f32.mrf.mxu0
  %v85 = vadd.f32 0.0, %v84
  %86 = vmatmul.f32.gmra.mxu0 %v43
  %v87 = vpop.f32.mrf.mxu0
  %v88 = vadd.f32 0.0, %v87
  %89 = vmatmul.f32.gmra.mxu0 %v46
  %v90 = vpop.f32.mrf.mxu0
  %v91 = vadd.f32 0.0, %v90
  %92 = vmatmul.f32.gmra.mxu0 %v49
  %v93 = vpop.f32.mrf.mxu0
  %v94 = vadd.f32 0.0, %v93
  %95 = vmatmul.f32.gmra.mxu0 %v52
  %v96 = vpop.f32.mrf.mxu0
  %v97 = vadd.f32 0.0, %v96
  %98 = vmatmul.f32.gmra.mxu0 %v55
  %v99 = vpop.f32.mrf.mxu0
  %v100 = vadd.f32 0.0, %v99
  %101 = vdwg.mxu0
  %v102 = vld [vmem:[%s3] sm:$0xff]
  %v103 = vld [vmem:[%s3 + $0x8] sm:$0xff]
  %v104 = vld [vmem:[%s3 + $0x10] sm:$0xff]
  %v105 = vld [vmem:[%s3 + $0x18] sm:$0xff]
  %v106 = vld [vmem:[%s3 + $0x20] sm:$0xff]
  %v107 = vld [vmem:[%s3 + $0x28] sm:$0xff]
  %v108 = vld [vmem:[%s3 + $0x30] sm:$0xff]
  %v109 = vld [vmem:[%s3 + $0x38] sm:$0xff]
  %v110 = vld [vmem:[%s2] sm:$0xff]
  %v111 = vld [vmem:[%s2 + $0x8] sm:$0xff]
  %v112 = vld [vmem:[%s2 + $0x10] sm:$0xff]
  %v113 = vld [vmem:[%s2 + $0x18] sm:$0xff]
  %v114 = vld [vmem:[%s2 + $0x20] sm:$0xff]
  %v115 = vld [vmem:[%s2 + $0x28] sm:$0xff]
  %v116 = vld [vmem:[%s2 + $0x30] sm:$0xff]
  %v117 = vld [vmem:[%s2 + $0x38] sm:$0xff]
  %v118 = vld [vmem:[%s4] sm:$0xff]
  %v119 = vld [vmem:[%s4 + $0x8] sm:$0xff]
  %v120 = vld [vmem:[%s4 + $0x10] sm:$0xff]
  %v121 = vld [vmem:[%s4 + $0x18] sm:$0xff]
  %v122 = vld [vmem:[%s4 + $0x20] sm:$0xff]
  %v123 = vld [vmem:[%s4 + $0x28] sm:$0xff]
  %v124 = vld [vmem:[%s4 + $0x30] sm:$0xff]
  %v125 = vld [vmem:[%s4 + $0x38] sm:$0xff]
  %v126 = vld [vmem:[%s5] sm:$0xff]
  %v127 = vld [vmem:[%s5 + $0x8] sm:$0xff]
  %v128 = vld [vmem:[%s5 + $0x10] sm:$0xff]
  %v129 = vld [vmem:[%s5 + $0x18] sm:$0xff]
  %v130 = vld [vmem:[%s5 + $0x20] sm:$0xff]
  %v131 = vld [vmem:[%s5 + $0x28] sm:$0xff]
  %v132 = vld [vmem:[%s5 + $0x30] sm:$0xff]
  %v133 = vld [vmem:[%s5 + $0x38] sm:$0xff]
  %135 = vset.pattern.permute.xlu0 0
  %136 = vperm.xlu0 %135, %v102
  %v137 = vpop.permute.xlu0 %136
  %140 = vset.pattern.permute.xlu0 0
  %141 = vperm.xlu0 %140, %v103
  %v142 = vpop.permute.xlu0 %141
  %145 = vset.pattern.permute.xlu0 0
  %146 = vperm.xlu0 %145, %v104
  %v147 = vpop.permute.xlu0 %146
  %150 = vset.pattern.permute.xlu0 0
  %151 = vperm.xlu0 %150, %v105
  %v152 = vpop.permute.xlu0 %151
  %155 = vset.pattern.permute.xlu0 0
  %156 = vperm.xlu0 %155, %v106
  %v157 = vpop.permute.xlu0 %156
  %160 = vset.pattern.permute.xlu0 0
  %161 = vperm.xlu0 %160, %v107
  %v162 = vpop.permute.xlu0 %161
  %165 = vset.pattern.permute.xlu0 0
  %166 = vperm.xlu0 %165, %v108
  %v167 = vpop.permute.xlu0 %166
  %170 = vset.pattern.permute.xlu0 0
  %171 = vperm.xlu0 %170, %v109
  %v172 = vpop.permute.xlu0 %171
  %v174 = vadd.f32 %v79, %v137
  %v175 = vadd.f32 %v82, %v142
  %v176 = vadd.f32 %v85, %v147
  %v177 = vadd.f32 %v88, %v152
  %v178 = vadd.f32 %v91, %v157
  %v179 = vadd.f32 %v94, %v162
  %v180 = vadd.f32 %v97, %v167
  %v181 = vadd.f32 %v100, %v172
  %v182 = vmul.f32 %v174, %v110
  %v183 = vmul.f32 %v175, %v111
  %v184 = vmul.f32 %v176, %v112
  %v185 = vmul.f32 %v177, %v113
  %v186 = vmul.f32 %v178, %v114
  %v187 = vmul.f32 %v179, %v115
  %v188 = vmul.f32 %v180, %v116
  %v189 = vmul.f32 %v181, %v117
  %vm190 = vcmask 64512
  %v191 = vsel %vm190, %v182, 0.0
  %192 = vadd.xlane.f32.xlu0 %v191
  %v193 = vpop.xlane.xlu0 %192
  %v194 = vsel %vm190, %v183, 0.0
  %195 = vadd.xlane.f32.xlu0 %v194
  %v196 = vpop.xlane.xlu0 %195
  %v197 = vsel %vm190, %v184, 0.0
  %198 = vadd.xlane.f32.xlu0 %v197
  %v199 = vpop.xlane.xlu0 %198
  %v200 = vsel %vm190, %v185, 0.0
  %201 = vadd.xlane.f32.xlu0 %v200
  %v202 = vpop.xlane.xlu0 %201
  %v203 = vsel %vm190, %v186, 0.0
  %204 = vadd.xlane.f32.xlu0 %v203
  %v205 = vpop.xlane.xlu0 %204
  %v206 = vsel %vm190, %v187, 0.0
  %207 = vadd.xlane.f32.xlu0 %v206
  %v208 = vpop.xlane.xlu0 %207
  %v209 = vsel %vm190, %v188, 0.0
  %210 = vadd.xlane.f32.xlu0 %v209
  %v211 = vpop.xlane.xlu0 %210
  %v212 = vsel %vm190, %v189, 0.0
  %213 = vadd.xlane.f32.xlu0 %v212
  %v214 = vpop.xlane.xlu0 %213
  %v215 = vrot.slane %v193, 4
  %v216 = vadd.f32 %v193, %v215
  %v217 = vrot.slane %v216, 2
  %v218 = vadd.f32 %v216, %v217
  %v219 = vrot.slane %v218, 1
  %v220 = vadd.f32 %v218, %v219
  %v221 = vrot.slane %v196, 4
  %v222 = vadd.f32 %v196, %v221
  %v223 = vrot.slane %v222, 2
  %v224 = vadd.f32 %v222, %v223
  %v225 = vrot.slane %v224, 1
  %v226 = vadd.f32 %v224, %v225
  %v227 = vrot.slane %v199, 4
  %v228 = vadd.f32 %v199, %v227
  %v229 = vrot.slane %v228, 2
  %v230 = vadd.f32 %v228, %v229
  %v231 = vrot.slane %v230, 1
  %v232 = vadd.f32 %v230, %v231
  %v233 = vrot.slane %v202, 4
  %v234 = vadd.f32 %v202, %v233
  %v235 = vrot.slane %v234, 2
  %v236 = vadd.f32 %v234, %v235
  %v237 = vrot.slane %v236, 1
  %v238 = vadd.f32 %v236, %v237
  %v239 = vrot.slane %v205, 4
  %v240 = vadd.f32 %v205, %v239
  %v241 = vrot.slane %v240, 2
  %v242 = vadd.f32 %v240, %v241
  %v243 = vrot.slane %v242, 1
  %v244 = vadd.f32 %v242, %v243
  %v245 = vrot.slane %v208, 4
  %v246 = vadd.f32 %v208, %v245
  %v247 = vrot.slane %v246, 2
  %v248 = vadd.f32 %v246, %v247
  %v249 = vrot.slane %v248, 1
  %v250 = vadd.f32 %v248, %v249
  %v251 = vrot.slane %v211, 4
  %v252 = vadd.f32 %v211, %v251
  %v253 = vrot.slane %v252, 2
  %v254 = vadd.f32 %v252, %v253
  %v255 = vrot.slane %v254, 1
  %v256 = vadd.f32 %v254, %v255
  %v257 = vrot.slane %v214, 4
  %v258 = vadd.f32 %v214, %v257
  %v259 = vrot.slane %v258, 2
  %v260 = vadd.f32 %v258, %v259
  %v261 = vrot.slane %v260, 1
  %v262 = vadd.f32 %v260, %v261
  %v263 = vadd.f32 %v220, %v232
  %v264 = vadd.f32 %v263, %v244
  %v265 = vadd.f32 %v264, %v256
  %v266 = vadd.f32 %v226, %v238
  %v267 = vadd.f32 %v266, %v250
  %v268 = vadd.f32 %v267, %v262
  %v269 = vmul.f32 %v265, 0.0048076925
  %v270 = vmul.f32 %v268, 0.0048076925
  %v271 = vsub.f32 %v174, %v269
  %v272 = vsub.f32 %v175, %v270
  %v273 = vsub.f32 %v176, %v269
  %v274 = vsub.f32 %v177, %v270
  %v275 = vsub.f32 %v178, %v269
  %v276 = vsub.f32 %v179, %v270
  %v277 = vsub.f32 %v180, %v269
  %v278 = vsub.f32 %v181, %v270
  %v279 = vmul.f32 %v271, %v110
  %v280 = vmul.f32 %v272, %v111
  %v281 = vmul.f32 %v273, %v112
  %v282 = vmul.f32 %v274, %v113
  %v283 = vmul.f32 %v275, %v114
  %v284 = vmul.f32 %v276, %v115
  %v285 = vmul.f32 %v277, %v116
  %v286 = vmul.f32 %v278, %v117
  %v287 = vmul.f32 %v279, %v279
  %v288 = vmul.f32 %v280, %v280
  %v289 = vmul.f32 %v281, %v281
  %v290 = vmul.f32 %v282, %v282
  %v291 = vmul.f32 %v283, %v283
  %v292 = vmul.f32 %v284, %v284
  %v293 = vmul.f32 %v285, %v285
  %v294 = vmul.f32 %v286, %v286
  %v295 = vsel %vm190, %v287, 0.0
  %296 = vadd.xlane.f32.xlu0 %v295
  %v297 = vpop.xlane.xlu0 %296
  %v298 = vsel %vm190, %v288, 0.0
  %299 = vadd.xlane.f32.xlu0 %v298
  %v300 = vpop.xlane.xlu0 %299
  %v301 = vsel %vm190, %v289, 0.0
  %302 = vadd.xlane.f32.xlu0 %v301
  %v303 = vpop.xlane.xlu0 %302
  %v304 = vsel %vm190, %v290, 0.0
  %305 = vadd.xlane.f32.xlu0 %v304
  %v306 = vpop.xlane.xlu0 %305
  %v307 = vsel %vm190, %v291, 0.0
  %308 = vadd.xlane.f32.xlu0 %v307
  %v309 = vpop.xlane.xlu0 %308
  %v310 = vsel %vm190, %v292, 0.0
  %311 = vadd.xlane.f32.xlu0 %v310
  %v312 = vpop.xlane.xlu0 %311
  %v313 = vsel %vm190, %v293, 0.0
  %314 = vadd.xlane.f32.xlu0 %v313
  %v315 = vpop.xlane.xlu0 %314
  %v316 = vsel %vm190, %v294, 0.0
  %317 = vadd.xlane.f32.xlu0 %v316
  %v318 = vpop.xlane.xlu0 %317
  %v319 = vrot.slane %v297, 4
  %v320 = vadd.f32 %v297, %v319
  %v321 = vrot.slane %v320, 2
  %v322 = vadd.f32 %v320, %v321
  %v323 = vrot.slane %v322, 1
  %v324 = vadd.f32 %v322, %v323
  %v325 = vrot.slane %v300, 4
  %v326 = vadd.f32 %v300, %v325
  %v327 = vrot.slane %v326, 2
  %v328 = vadd.f32 %v326, %v327
  %v329 = vrot.slane %v328, 1
  %v330 = vadd.f32 %v328, %v329
  %v331 = vrot.slane %v303, 4
  %v332 = vadd.f32 %v303, %v331
  %v333 = vrot.slane %v332, 2
  %v334 = vadd.f32 %v332, %v333
  %v335 = vrot.slane %v334, 1
  %v336 = vadd.f32 %v334, %v335
  %v337 = vrot.slane %v306, 4
  %v338 = vadd.f32 %v306, %v337
  %v339 = vrot.slane %v338, 2
  %v340 = vadd.f32 %v338, %v339
  %v341 = vrot.slane %v340, 1
  %v342 = vadd.f32 %v340, %v341
  %v343 = vrot.slane %v309, 4
  %v344 = vadd.f32 %v309, %v343
  %v345 = vrot.slane %v344, 2
  %v346 = vadd.f32 %v344, %v345
  %v347 = vrot.slane %v346, 1
  %v348 = vadd.f32 %v346, %v347
  %v349 = vrot.slane %v312, 4
  %v350 = vadd.f32 %v312, %v349
  %v351 = vrot.slane %v350, 2
  %v352 = vadd.f32 %v350, %v351
  %v353 = vrot.slane %v352, 1
  %v354 = vadd.f32 %v352, %v353
  %v355 = vrot.slane %v315, 4
  %v356 = vadd.f32 %v315, %v355
  %v357 = vrot.slane %v356, 2
  %v358 = vadd.f32 %v356, %v357
  %v359 = vrot.slane %v358, 1
  %v360 = vadd.f32 %v358, %v359
  %v361 = vrot.slane %v318, 4
  %v362 = vadd.f32 %v318, %v361
  %v363 = vrot.slane %v362, 2
  %v364 = vadd.f32 %v362, %v363
  %v365 = vrot.slane %v364, 1
  %v366 = vadd.f32 %v364, %v365
  %v367 = vadd.f32 %v324, %v336
  %v368 = vadd.f32 %v367, %v348
  %v369 = vadd.f32 %v368, %v360
  %v370 = vadd.f32 %v330, %v342
  %v371 = vadd.f32 %v370, %v354
  %v372 = vadd.f32 %v371, %v366
  %v373 = vmul.f32 %v369, 0.0048076925
  %v374 = vmul.f32 %v372, 0.0048076925
  %v375 = vadd.f32 %v373, 1e-05
  %v376 = vadd.f32 %v374, 1e-05
  %v377 = vrsqrt.pop %v375
  %v378 = vmul.f32 %v377, %v375
  %v379 = vmul.f32 %v378, %v377
  %v380 = vmul.f32 0.5, %v379
  %v381 = vsub.f32 1.5, %v380
  %v382 = vmul.f32 %v377, %v381
  %vm383 = vweird.f32 %v375
  %vm384 = vweird.f32 %v377
  %vm385 = vmor %vm383, %vm384
  %v386 = vsel %vm385, %v377, %v382
  %v387 = vrsqrt.pop %v376
  %v388 = vmul.f32 %v387, %v376
  %v389 = vmul.f32 %v388, %v387
  %v390 = vmul.f32 0.5, %v389
  %v391 = vsub.f32 1.5, %v390
  %v392 = vmul.f32 %v387, %v391
  %vm393 = vweird.f32 %v376
  %vm394 = vweird.f32 %v387
  %vm395 = vmor %vm393, %vm394
  %v396 = vsel %vm395, %v387, %v392
  %v397 = vmul.f32 %v118, %v386
  %v398 = vmul.f32 %v119, %v396
  %v399 = vmul.f32 %v120, %v386
  %v400 = vmul.f32 %v121, %v396
  %v401 = vmul.f32 %v122, %v386
  %v402 = vmul.f32 %v123, %v396
  %v403 = vmul.f32 %v124, %v386
  %v404 = vmul.f32 %v125, %v396
  %v405 = vmul.f32 %v269, %v397
  %v406 = vmul.f32 %v270, %v398
  %v407 = vmul.f32 %v269, %v399
  %v408 = vmul.f32 %v270, %v400
  %v409 = vmul.f32 %v269, %v401
  %v410 = vmul.f32 %v270, %v402
  %v411 = vmul.f32 %v269, %v403
  %v412 = vmul.f32 %v270, %v404
  %v413 = vsub.f32 %v126, %v405
  %v414 = vsub.f32 %v127, %v406
  %v415 = vsub.f32 %v128, %v407
  %v416 = vsub.f32 %v129, %v408
  %v417 = vsub.f32 %v130, %v409
  %v418 = vsub.f32 %v131, %v410
  %v419 = vsub.f32 %v132, %v411
  %v420 = vsub.f32 %v133, %v412
  %422 = vset.pattern.permute.xlu0 0
  %423 = vperm.xlu0 %422, %v397
  %v424 = vpop.permute.xlu0 %423
  %427 = vset.pattern.permute.xlu0 0
  %428 = vperm.xlu0 %427, %v398
  %v429 = vpop.permute.xlu0 %428
  %432 = vset.pattern.permute.xlu0 0
  %433 = vperm.xlu0 %432, %v399
  %v434 = vpop.permute.xlu0 %433
  %437 = vset.pattern.permute.xlu0 0
  %438 = vperm.xlu0 %437, %v400
  %v439 = vpop.permute.xlu0 %438
  %442 = vset.pattern.permute.xlu0 0
  %443 = vperm.xlu0 %442, %v401
  %v444 = vpop.permute.xlu0 %443
  %447 = vset.pattern.permute.xlu0 0
  %448 = vperm.xlu0 %447, %v402
  %v449 = vpop.permute.xlu0 %448
  %452 = vset.pattern.permute.xlu0 0
  %453 = vperm.xlu0 %452, %v403
  %v454 = vpop.permute.xlu0 %453
  %457 = vset.pattern.permute.xlu0 0
  %458 = vperm.xlu0 %457, %v404
  %v459 = vpop.permute.xlu0 %458
  %v461 = vmul.f32 %v174, %v424
  %v462 = vmul.f32 %v175, %v429
  %v463 = vmul.f32 %v176, %v434
  %v464 = vmul.f32 %v177, %v439
  %v465 = vmul.f32 %v178, %v444
  %v466 = vmul.f32 %v179, %v449
  %v467 = vmul.f32 %v180, %v454
  %v468 = vmul.f32 %v181, %v459
  %470 = vset.pattern.permute.xlu0 0
  %471 = vperm.xlu0 %470, %v413
  %v472 = vpop.permute.xlu0 %471
  %475 = vset.pattern.permute.xlu0 0
  %476 = vperm.xlu0 %475, %v414
  %v477 = vpop.permute.xlu0 %476
  %480 = vset.pattern.permute.xlu0 0
  %481 = vperm.xlu0 %480, %v415
  %v482 = vpop.permute.xlu0 %481
  %485 = vset.pattern.permute.xlu0 0
  %486 = vperm.xlu0 %485, %v416
  %v487 = vpop.permute.xlu0 %486
  %490 = vset.pattern.permute.xlu0 0
  %491 = vperm.xlu0 %490, %v417
  %v492 = vpop.permute.xlu0 %491
  %495 = vset.pattern.permute.xlu0 0
  %496 = vperm.xlu0 %495, %v418
  %v497 = vpop.permute.xlu0 %496
  %500 = vset.pattern.permute.xlu0 0
  %501 = vperm.xlu0 %500, %v419
  %v502 = vpop.permute.xlu0 %501
  %505 = vset.pattern.permute.xlu0 0
  %506 = vperm.xlu0 %505, %v420
  %v507 = vpop.permute.xlu0 %506
  %v509 = vadd.f32 %v461, %v472
  %v510 = vadd.f32 %v462, %v477
  %v511 = vadd.f32 %v463, %v482
  %v512 = vadd.f32 %v464, %v487
  %v513 = vadd.f32 %v465, %v492
  %v514 = vadd.f32 %v466, %v497
  %v515 = vadd.f32 %v467, %v502
  %v516 = vadd.f32 %v468, %v507
  %vm517 = vcmp.ge.f32.partialorder %v509, 0.0
  %vm518 = vcmp.ge.f32.partialorder %v510, 0.0
  %vm519 = vcmp.ge.f32.partialorder %v511, 0.0
  %vm520 = vcmp.ge.f32.partialorder %v512, 0.0
  %vm521 = vcmp.ge.f32.partialorder %v513, 0.0
  %vm522 = vcmp.ge.f32.partialorder %v514, 0.0
  %vm523 = vcmp.ge.f32.partialorder %v515, 0.0
  %vm524 = vcmp.ge.f32.partialorder %v516, 0.0
  %v525 = vmul.f32 %v509, 0.01
  %v526 = vmul.f32 %v510, 0.01
  %v527 = vmul.f32 %v511, 0.01
  %v528 = vmul.f32 %v512, 0.01
  %v529 = vmul.f32 %v513, 0.01
  %v530 = vmul.f32 %v514, 0.01
  %v531 = vmul.f32 %v515, 0.01
  %v532 = vmul.f32 %v516, 0.01
  %v533 = vsel %vm517, %v509, %v525
  %v534 = vsel %vm518, %v510, %v526
  %v535 = vsel %vm519, %v511, %v527
  %v536 = vsel %vm520, %v512, %v528
  %v537 = vsel %vm521, %v513, %v529
  %v538 = vsel %vm522, %v514, %v530
  %v539 = vsel %vm523, %v515, %v531
  %v540 = vsel %vm524, %v516, %v532
  %549 = vrot.lane.b32.xlu0 %v110, 8
  %v550 = vpop.permute.xlu0 %549
  %551 = vrot.lane.b32.xlu0 %v111, 8
  %v552 = vpop.permute.xlu0 %551
  %553 = vrot.lane.b32.xlu0 %v112, 8
  %v554 = vpop.permute.xlu0 %553
  %555 = vrot.lane.b32.xlu0 %v113, 8
  %v556 = vpop.permute.xlu0 %555
  %557 = vrot.lane.b32.xlu0 %v114, 8
  %v558 = vpop.permute.xlu0 %557
  %559 = vrot.lane.b32.xlu0 %v115, 8
  %v560 = vpop.permute.xlu0 %559
  %561 = vrot.lane.b32.xlu0 %v116, 8
  %v562 = vpop.permute.xlu0 %561
  %563 = vrot.lane.b32.xlu0 %v117, 8
  %v564 = vpop.permute.xlu0 %563
  %v573 = vmul.f32 %v174, %v550
  %v574 = vmul.f32 %v175, %v552
  %v575 = vmul.f32 %v176, %v554
  %v576 = vmul.f32 %v177, %v556
  %v577 = vmul.f32 %v178, %v558
  %v578 = vmul.f32 %v179, %v560
  %v579 = vmul.f32 %v180, %v562
  %v580 = vmul.f32 %v181, %v564
  %589 = vrot.lane.b32.xlu0 %v573, 120
  %v590 = vpop.permute.xlu0 %589
  %591 = vrot.lane.b32.xlu0 %v574, 120
  %v592 = vpop.permute.xlu0 %591
  %593 = vrot.lane.b32.xlu0 %v575, 120
  %v594 = vpop.permute.xlu0 %593
  %595 = vrot.lane.b32.xlu0 %v576, 120
  %v596 = vpop.permute.xlu0 %595
  %597 = vrot.lane.b32.xlu0 %v577, 120
  %v598 = vpop.permute.xlu0 %597
  %599 = vrot.lane.b32.xlu0 %v578, 120
  %v600 = vpop.permute.xlu0 %599
  %601 = vrot.lane.b32.xlu0 %v579, 120
  %v602 = vpop.permute.xlu0 %601
  %603 = vrot.lane.b32.xlu0 %v580, 120
  %v604 = vpop.permute.xlu0 %603
  %v613 = vsel %vm190, %v590, 0.0
  %614 = vadd.xlane.f32.xlu0 %v613
  %v615 = vpop.xlane.xlu0 %614
  %v616 = vsel %vm190, %v592, 0.0
  %617 = vadd.xlane.f32.xlu0 %v616
  %v618 = vpop.xlane.xlu0 %617
  %v619 = vsel %vm190, %v594, 0.0
  %620 = vadd.xlane.f32.xlu0 %v619
  %v621 = vpop.xlane.xlu0 %620
  %v622 = vsel %vm190, %v596, 0.0
  %623 = vadd.xlane.f32.xlu0 %v622
  %v624 = vpop.xlane.xlu0 %623
  %v625 = vsel %vm190, %v598, 0.0
  %626 = vadd.xlane.f32.xlu0 %v625
  %v627 = vpop.xlane.xlu0 %626
  %v628 = vsel %vm190, %v600, 0.0
  %629 = vadd.xlane.f32.xlu0 %v628
  %v630 = vpop.xlane.xlu0 %629
  %v631 = vsel %vm190, %v602, 0.0
  %632 = vadd.xlane.f32.xlu0 %v631
  %v633 = vpop.xlane.xlu0 %632
  %v634 = vsel %vm190, %v604, 0.0
  %635 = vadd.xlane.f32.xlu0 %v634
  %v636 = vpop.xlane.xlu0 %635
  %v637 = vrot.slane %v615, 4
  %v638 = vadd.f32 %v615, %v637
  %v639 = vrot.slane %v638, 2
  %v640 = vadd.f32 %v638, %v639
  %v641 = vrot.slane %v640, 1
  %v642 = vadd.f32 %v640, %v641
  %v643 = vrot.slane %v618, 4
  %v644 = vadd.f32 %v618, %v643
  %v645 = vrot.slane %v644, 2
  %v646 = vadd.f32 %v644, %v645
  %v647 = vrot.slane %v646, 1
  %v648 = vadd.f32 %v646, %v647
  %v649 = vrot.slane %v621, 4
  %v650 = vadd.f32 %v621, %v649
  %v651 = vrot.slane %v650, 2
  %v652 = vadd.f32 %v650, %v651
  %v653 = vrot.slane %v652, 1
  %v654 = vadd.f32 %v652, %v653
  %v655 = vrot.slane %v624, 4
  %v656 = vadd.f32 %v624, %v655
  %v657 = vrot.slane %v656, 2
  %v658 = vadd.f32 %v656, %v657
  %v659 = vrot.slane %v658, 1
  %v660 = vadd.f32 %v658, %v659
  %v661 = vrot.slane %v627, 4
  %v662 = vadd.f32 %v627, %v661
  %v663 = vrot.slane %v662, 2
  %v664 = vadd.f32 %v662, %v663
  %v665 = vrot.slane %v664, 1
  %v666 = vadd.f32 %v664, %v665
  %v667 = vrot.slane %v630, 4
  %v668 = vadd.f32 %v630, %v667
  %v669 = vrot.slane %v668, 2
  %v670 = vadd.f32 %v668, %v669
  %v671 = vrot.slane %v670, 1
  %v672 = vadd.f32 %v670, %v671
  %v673 = vrot.slane %v633, 4
  %v674 = vadd.f32 %v633, %v673
  %v675 = vrot.slane %v674, 2
  %v676 = vadd.f32 %v674, %v675
  %v677 = vrot.slane %v676, 1
  %v678 = vadd.f32 %v676, %v677
  %v679 = vrot.slane %v636, 4
  %v680 = vadd.f32 %v636, %v679
  %v681 = vrot.slane %v680, 2
  %v682 = vadd.f32 %v680, %v681
  %v683 = vrot.slane %v682, 1
  %v684 = vadd.f32 %v682, %v683
  %v685 = vadd.f32 %v642, %v654
  %v686 = vadd.f32 %v685, %v666
  %v687 = vadd.f32 %v686, %v678
  %v688 = vadd.f32 %v648, %v660
  %v689 = vadd.f32 %v688, %v672
  %v690 = vadd.f32 %v689, %v684
  %v691 = vmul.f32 %v687, 0.0048076925
  %v692 = vmul.f32 %v690, 0.0048076925
  %v693 = vsub.f32 %v174, %v691
  %v694 = vsub.f32 %v175, %v692
  %v695 = vsub.f32 %v176, %v691
  %v696 = vsub.f32 %v177, %v692
  %v697 = vsub.f32 %v178, %v691
  %v698 = vsub.f32 %v179, %v692
  %v699 = vsub.f32 %v180, %v691
  %v700 = vsub.f32 %v181, %v692
  %v701 = vmul.f32 %v693, %v550
  %v702 = vmul.f32 %v694, %v552
  %v703 = vmul.f32 %v695, %v554
  %v704 = vmul.f32 %v696, %v556
  %v705 = vmul.f32 %v697, %v558
  %v706 = vmul.f32 %v698, %v560
  %v707 = vmul.f32 %v699, %v562
  %v708 = vmul.f32 %v700, %v564
  %v709 = vmul.f32 %v701, %v701
  %v710 = vmul.f32 %v702, %v702
  %v711 = vmul.f32 %v703, %v703
  %v712 = vmul.f32 %v704, %v704
  %v713 = vmul.f32 %v705, %v705
  %v714 = vmul.f32 %v706, %v706
  %v715 = vmul.f32 %v707, %v707
  %v716 = vmul.f32 %v708, %v708
  %725 = vrot.lane.b32.xlu0 %v709, 120
  %v726 = vpop.permute.xlu0 %725
  %727 = vrot.lane.b32.xlu0 %v710, 120
  %v728 = vpop.permute.xlu0 %727
  %729 = vrot.lane.b32.xlu0 %v711, 120
  %v730 = vpop.permute.xlu0 %729
  %731 = vrot.lane.b32.xlu0 %v712, 120
  %v732 = vpop.permute.xlu0 %731
  %733 = vrot.lane.b32.xlu0 %v713, 120
  %v734 = vpop.permute.xlu0 %733
  %735 = vrot.lane.b32.xlu0 %v714, 120
  %v736 = vpop.permute.xlu0 %735
  %737 = vrot.lane.b32.xlu0 %v715, 120
  %v738 = vpop.permute.xlu0 %737
  %739 = vrot.lane.b32.xlu0 %v716, 120
  %v740 = vpop.permute.xlu0 %739
  %v749 = vsel %vm190, %v726, 0.0
  %750 = vadd.xlane.f32.xlu0 %v749
  %v751 = vpop.xlane.xlu0 %750
  %v752 = vsel %vm190, %v728, 0.0
  %753 = vadd.xlane.f32.xlu0 %v752
  %v754 = vpop.xlane.xlu0 %753
  %v755 = vsel %vm190, %v730, 0.0
  %756 = vadd.xlane.f32.xlu0 %v755
  %v757 = vpop.xlane.xlu0 %756
  %v758 = vsel %vm190, %v732, 0.0
  %759 = vadd.xlane.f32.xlu0 %v758
  %v760 = vpop.xlane.xlu0 %759
  %v761 = vsel %vm190, %v734, 0.0
  %762 = vadd.xlane.f32.xlu0 %v761
  %v763 = vpop.xlane.xlu0 %762
  %v764 = vsel %vm190, %v736, 0.0
  %765 = vadd.xlane.f32.xlu0 %v764
  %v766 = vpop.xlane.xlu0 %765
  %v767 = vsel %vm190, %v738, 0.0
  %768 = vadd.xlane.f32.xlu0 %v767
  %v769 = vpop.xlane.xlu0 %768
  %v770 = vsel %vm190, %v740, 0.0
  %771 = vadd.xlane.f32.xlu0 %v770
  %v772 = vpop.xlane.xlu0 %771
  %v773 = vrot.slane %v751, 4
  %v774 = vadd.f32 %v751, %v773
  %v775 = vrot.slane %v774, 2
  %v776 = vadd.f32 %v774, %v775
  %v777 = vrot.slane %v776, 1
  %v778 = vadd.f32 %v776, %v777
  %v779 = vrot.slane %v754, 4
  %v780 = vadd.f32 %v754, %v779
  %v781 = vrot.slane %v780, 2
  %v782 = vadd.f32 %v780, %v781
  %v783 = vrot.slane %v782, 1
  %v784 = vadd.f32 %v782, %v783
  %v785 = vrot.slane %v757, 4
  %v786 = vadd.f32 %v757, %v785
  %v787 = vrot.slane %v786, 2
  %v788 = vadd.f32 %v786, %v787
  %v789 = vrot.slane %v788, 1
  %v790 = vadd.f32 %v788, %v789
  %v791 = vrot.slane %v760, 4
  %v792 = vadd.f32 %v760, %v791
  %v793 = vrot.slane %v792, 2
  %v794 = vadd.f32 %v792, %v793
  %v795 = vrot.slane %v794, 1
  %v796 = vadd.f32 %v794, %v795
  %v797 = vrot.slane %v763, 4
  %v798 = vadd.f32 %v763, %v797
  %v799 = vrot.slane %v798, 2
  %v800 = vadd.f32 %v798, %v799
  %v801 = vrot.slane %v800, 1
  %v802 = vadd.f32 %v800, %v801
  %v803 = vrot.slane %v766, 4
  %v804 = vadd.f32 %v766, %v803
  %v805 = vrot.slane %v804, 2
  %v806 = vadd.f32 %v804, %v805
  %v807 = vrot.slane %v806, 1
  %v808 = vadd.f32 %v806, %v807
  %v809 = vrot.slane %v769, 4
  %v810 = vadd.f32 %v769, %v809
  %v811 = vrot.slane %v810, 2
  %v812 = vadd.f32 %v810, %v811
  %v813 = vrot.slane %v812, 1
  %v814 = vadd.f32 %v812, %v813
  %v815 = vrot.slane %v772, 4
  %v816 = vadd.f32 %v772, %v815
  %v817 = vrot.slane %v816, 2
  %v818 = vadd.f32 %v816, %v817
  %v819 = vrot.slane %v818, 1
  %v820 = vadd.f32 %v818, %v819
  %v821 = vadd.f32 %v778, %v790
  %v822 = vadd.f32 %v821, %v802
  %v823 = vadd.f32 %v822, %v814
  %v824 = vadd.f32 %v784, %v796
  %v825 = vadd.f32 %v824, %v808
  %v826 = vadd.f32 %v825, %v820
  %v827 = vmul.f32 %v823, 0.0048076925
  %v828 = vmul.f32 %v826, 0.0048076925
  %v829 = vadd.f32 %v827, 1e-05
  %v830 = vadd.f32 %v828, 1e-05
  %v831 = vrsqrt.pop %v829
  %v832 = vmul.f32 %v831, %v829
  %v833 = vmul.f32 %v832, %v831
  %v834 = vmul.f32 0.5, %v833
  %v835 = vsub.f32 1.5, %v834
  %v836 = vmul.f32 %v831, %v835
  %vm837 = vweird.f32 %v829
  %vm838 = vweird.f32 %v831
  %vm839 = vmor %vm837, %vm838
  %v840 = vsel %vm839, %v831, %v836
  %v841 = vrsqrt.pop %v830
  %v842 = vmul.f32 %v841, %v830
  %v843 = vmul.f32 %v842, %v841
  %v844 = vmul.f32 0.5, %v843
  %v845 = vsub.f32 1.5, %v844
  %v846 = vmul.f32 %v841, %v845
  %vm847 = vweird.f32 %v830
  %vm848 = vweird.f32 %v841
  %vm849 = vmor %vm847, %vm848
  %v850 = vsel %vm849, %v841, %v846
  %v851 = vmul.f32 %v118, %v840
  %v852 = vmul.f32 %v119, %v850
  %v853 = vmul.f32 %v120, %v840
  %v854 = vmul.f32 %v121, %v850
  %v855 = vmul.f32 %v122, %v840
  %v856 = vmul.f32 %v123, %v850
  %v857 = vmul.f32 %v124, %v840
  %v858 = vmul.f32 %v125, %v850
  %v859 = vmul.f32 %v691, %v851
  %v860 = vmul.f32 %v692, %v852
  %v861 = vmul.f32 %v691, %v853
  %v862 = vmul.f32 %v692, %v854
  %v863 = vmul.f32 %v691, %v855
  %v864 = vmul.f32 %v692, %v856
  %v865 = vmul.f32 %v691, %v857
  %v866 = vmul.f32 %v692, %v858
  %v867 = vsub.f32 %v126, %v859
  %v868 = vsub.f32 %v127, %v860
  %v869 = vsub.f32 %v128, %v861
  %v870 = vsub.f32 %v129, %v862
  %v871 = vsub.f32 %v130, %v863
  %v872 = vsub.f32 %v131, %v864
  %v873 = vsub.f32 %v132, %v865
  %v874 = vsub.f32 %v133, %v866
  %876 = vset.pattern.permute.xlu0 0
  %877 = vperm.xlu0 %876, %v851
  %v878 = vpop.permute.xlu0 %877
  %881 = vset.pattern.permute.xlu0 0
  %882 = vperm.xlu0 %881, %v852
  %v883 = vpop.permute.xlu0 %882
  %886 = vset.pattern.permute.xlu0 0
  %887 = vperm.xlu0 %886, %v853
  %v888 = vpop.permute.xlu0 %887
  %891 = vset.pattern.permute.xlu0 0
  %892 = vperm.xlu0 %891, %v854
  %v893 = vpop.permute.xlu0 %892
  %896 = vset.pattern.permute.xlu0 0
  %897 = vperm.xlu0 %896, %v855
  %v898 = vpop.permute.xlu0 %897
  %901 = vset.pattern.permute.xlu0 0
  %902 = vperm.xlu0 %901, %v856
  %v903 = vpop.permute.xlu0 %902
  %906 = vset.pattern.permute.xlu0 0
  %907 = vperm.xlu0 %906, %v857
  %v908 = vpop.permute.xlu0 %907
  %911 = vset.pattern.permute.xlu0 0
  %912 = vperm.xlu0 %911, %v858
  %v913 = vpop.permute.xlu0 %912
  %v915 = vmul.f32 %v174, %v878
  %v916 = vmul.f32 %v175, %v883
  %v917 = vmul.f32 %v176, %v888
  %v918 = vmul.f32 %v177, %v893
  %v919 = vmul.f32 %v178, %v898
  %v920 = vmul.f32 %v179, %v903
  %v921 = vmul.f32 %v180, %v908
  %v922 = vmul.f32 %v181, %v913
  %924 = vset.pattern.permute.xlu0 0
  %925 = vperm.xlu0 %924, %v867
  %v926 = vpop.permute.xlu0 %925
  %929 = vset.pattern.permute.xlu0 0
  %930 = vperm.xlu0 %929, %v868
  %v931 = vpop.permute.xlu0 %930
  %934 = vset.pattern.permute.xlu0 0
  %935 = vperm.xlu0 %934, %v869
  %v936 = vpop.permute.xlu0 %935
  %939 = vset.pattern.permute.xlu0 0
  %940 = vperm.xlu0 %939, %v870
  %v941 = vpop.permute.xlu0 %940
  %944 = vset.pattern.permute.xlu0 0
  %945 = vperm.xlu0 %944, %v871
  %v946 = vpop.permute.xlu0 %945
  %949 = vset.pattern.permute.xlu0 0
  %950 = vperm.xlu0 %949, %v872
  %v951 = vpop.permute.xlu0 %950
  %954 = vset.pattern.permute.xlu0 0
  %955 = vperm.xlu0 %954, %v873
  %v956 = vpop.permute.xlu0 %955
  %959 = vset.pattern.permute.xlu0 0
  %960 = vperm.xlu0 %959, %v874
  %v961 = vpop.permute.xlu0 %960
  %v963 = vadd.f32 %v915, %v926
  %v964 = vadd.f32 %v916, %v931
  %v965 = vadd.f32 %v917, %v936
  %v966 = vadd.f32 %v918, %v941
  %v967 = vadd.f32 %v919, %v946
  %v968 = vadd.f32 %v920, %v951
  %v969 = vadd.f32 %v921, %v956
  %v970 = vadd.f32 %v922, %v961
  %vm971 = vcmp.ge.f32.partialorder %v963, 0.0
  %vm972 = vcmp.ge.f32.partialorder %v964, 0.0
  %vm973 = vcmp.ge.f32.partialorder %v965, 0.0
  %vm974 = vcmp.ge.f32.partialorder %v966, 0.0
  %vm975 = vcmp.ge.f32.partialorder %v967, 0.0
  %vm976 = vcmp.ge.f32.partialorder %v968, 0.0
  %vm977 = vcmp.ge.f32.partialorder %v969, 0.0
  %vm978 = vcmp.ge.f32.partialorder %v970, 0.0
  %v979 = vmul.f32 %v963, 0.01
  %v980 = vmul.f32 %v964, 0.01
  %v981 = vmul.f32 %v965, 0.01
  %v982 = vmul.f32 %v966, 0.01
  %v983 = vmul.f32 %v967, 0.01
  %v984 = vmul.f32 %v968, 0.01
  %v985 = vmul.f32 %v969, 0.01
  %v986 = vmul.f32 %v970, 0.01
  %v987 = vsel %vm971, %v963, %v979
  %v988 = vsel %vm972, %v964, %v980
  %v989 = vsel %vm973, %v965, %v981
  %v990 = vsel %vm974, %v966, %v982
  %v991 = vsel %vm975, %v967, %v983
  %v992 = vsel %vm976, %v968, %v984
  %v993 = vsel %vm977, %v969, %v985
  %v994 = vsel %vm978, %v970, %v986
  %v995 = vsel %vm190, %v533, %v987
  %v996 = vsel %vm190, %v534, %v988
  %v997 = vsel %vm190, %v535, %v989
  %v998 = vsel %vm190, %v536, %v990
  %v999 = vsel %vm190, %v537, %v991
  %v1000 = vsel %vm190, %v538, %v992
  %v1001 = vsel %vm190, %v539, %v993
  %v1002 = vsel %vm190, %v540, %v994
  %vm1003 = vcmask 130048
  %1004 = vst.msk [vmem:[%s6] sm:$0xff] %vm1003, %v995
  %1005 = vst.msk [vmem:[%s6 + $0x8] sm:$0xff] %vm1003, %v996
  %1006 = vst.msk [vmem:[%s6 + $0x10] sm:$0xff] %vm1003, %v997
  %1007 = vst.msk [vmem:[%s6 + $0x18] sm:$0xff] %vm1003, %v998
  %1008 = vst.msk [vmem:[%s6 + $0x20] sm:$0xff] %vm1003, %v999
  %1009 = vst.msk [vmem:[%s6 + $0x28] sm:$0xff] %vm1003, %v1000
  %1010 = vst.msk [vmem:[%s6 + $0x30] sm:$0xff] %vm1003, %v1001
  %1011 = vst.msk [vmem:[%s6 + $0x38] sm:$0xff] %vm1003, %v1002
  // Predicated region
  $region26: #{trans_convolution_forward.1} parent=0 // pred_check
    _
  $region27: #{trans_convolution_forward.1} parent=0 // pred_check_branch
    %1013 = sbr.rel (0) target = $region29
  $region28: #{trans_convolution_forward.1} parent=0 // pred_region
    _
  $region29: #{trans_convolution_forward.1} parent=0 // pred_fallthru
    _
  // Predicated region
  $region30: #{trans_convolution_forward.1} parent=0 // pred_check
    _
  $region31: #{trans_convolution_forward.1} parent=0 // pred_check_branch
    %1015 = sbr.rel (0) target = $region33
  $region32: #{trans_convolution_forward.1} parent=0 // pred_region
    _
  $region33: #{trans_convolution_forward.1} parent=0 // pred_fallthru
    _

</llo_original>
